<compile_context>
chip_gen: v7x
topology: tpu7x:2x2x1
jax: 0.10.0
libtpu: 0.0.40
codegen_flags: <defaults>
</compile_context>

<pallas_src>
import functools

import jax
import jax.numpy as jnp
from jax.experimental import pallas as pl
from jax.experimental.pallas import tpu as pltpu

ESP = 1e-05
K = 0.99
B_CONST = 0.01


def classifier_kernel(feat_ref, anchor_ref, y_ref, loss_ref, pred_ref,
                      acc_ref, *, hw, num_classes):
    # feat_ref:   (TB, THW, C)  feature tile, channels lane-dense
    # anchor_ref: (C, NC)       pre-L2-normalized, pre-transposed anchors
    # y_ref:      (TB, NC)      labels
    # loss_ref:   (TB, 1)       per-example loss (mean over B done in wrapper)
    # pred_ref:   (TB, 1)       argmax class index
    # acc_ref:    (TB, C)       f32 spatial-sum accumulator (VMEM scratch)
    k = pl.program_id(1)

    @pl.when(k == 0)
    def _init():
        acc_ref[...] = jnp.zeros_like(acc_ref)

    # Adaptive avg-pool: accumulate spatial partial sums in f32 (even if the
    # feature stream is bf16).  Reduction is over the sublane axis; lanes stay
    # channel-dense, so this is cheap relative to the HBM-bound feat stream.
    acc_ref[...] += jnp.sum(feat_ref[...].astype(jnp.float32), axis=1)

    @pl.when(k == pl.num_programs(1) - 1)
    def _finalize():
        pooled = acc_ref[...] * jnp.float32(1.0 / hw)                 # (TB, C)

        # l2_norm(x) = x / (||x||_2 + ESP); reciprocal goes to the EUP slot.
        norm = jnp.sqrt(jnp.sum(pooled * pooled, axis=1, keepdims=True))
        x_norm = pooled * pl.reciprocal(norm + ESP, approx=False)     # (TB, C)

        # Cosine distance: anchors arrive as (C, NC), so the contraction dim is
        # already the RHS leading (sublane) dim -- no in-kernel transpose.
        dist = jax.lax.dot_general(
            x_norm, anchor_ref[...],
            dimension_numbers=(((1,), (0,)), ((), ())),
            preferred_element_type=jnp.float32)                       # (TB, NC)
        dist = (dist + 1.0) * 0.5                                     # fix_range
        dist = jnp.clip(dist, 0.0, 1.0)   # keeps log(1-K*dist) safe (no-op in f32)

        y = y_ref[...]
        inv_pos = pl.reciprocal(jnp.sum(y, axis=1, keepdims=True) + ESP,
                                approx=False)
        inv_neg = pl.reciprocal(jnp.sum(1.0 - y, axis=1, keepdims=True) + ESP,
                                approx=False)
        pos_loss = -jnp.sum(y * jnp.log(K * dist + B_CONST),
                            axis=1, keepdims=True) * inv_pos
        neg_loss = -jnp.sum((1.0 - y) * jnp.log(1.0 - K * dist),
                            axis=1, keepdims=True) * inv_neg
        loss_ref[...] = pos_loss + neg_loss                           # (TB, 1)

        # argmax (first-max index, matching torch/jnp default).
        max_v = jnp.max(dist, axis=1, keepdims=True)
        idx = jax.lax.broadcasted_iota(jnp.int32, dist.shape, 1)
        pred_ref[...] = jnp.min(
            jnp.where(dist == max_v, idx, jnp.int32(num_classes)),
            axis=1, keepdims=True)


def _round_up(x, m):
    return -(-x // m) * m


def _padded_feat_tile_bytes(tb, thw, c, itemsize):
    # Physical VMEM bytes of one (tb, thw, c) buffer after sublane/lane padding.
    sub = 8 * (4 // itemsize) if itemsize < 4 else 8      # 8 f32 / 16 bf16 / 32 i8
    return tb * _round_up(thw, sub) * _round_up(c, 128) * itemsize


def _vmem_cap_bytes():
    # Cap the scoped-VMEM request below physical capacity on every generation.
    try:
        cap = int(pltpu.get_tpu_info().vmem_capacity_bytes)
        return max(32 * 1024 * 1024, (cap * 3) // 4)
    except Exception:
        return 48 * 1024 * 1024       # safe even on v7x (64 MiB physical)


def _pick_batch_tile(b):
    # Sublane-legal batch tile; prefer B//TB >= 2 so the "parallel" batch axis
    # can shard across v7x's two TensorCores (no-op on single-TC v5e/v6e).
    if b % 8 == 0:
        for tb in (64, 32, 16, 8):
            if b % tb == 0 and b // tb >= 2:
                return tb
        return 8
    return b


def _pick_spatial_tile(hw, tb, c, itemsize, budget):
    # Largest sublane-legal spatial tile whose double-buffered, padded feature
    # tile fits the VMEM budget.  For ResNet heads HW is tiny (49) -> full.
    if hw % 8 != 0:
        return hw
    cands = sorted(
        {hw} | {t for t in (4096, 2048, 1024, 512, 256, 128, 64, 32, 16, 8)
                if t < hw and hw % t == 0},
        reverse=True)
    for thw in cands:
        if 2 * _padded_feat_tile_bytes(tb, thw, c, itemsize) <= budget:
            return thw
    return cands[-1]


def _call_kernel(feat, a_t, y_f32, *, b, hw, nc, tb, thw, vmem_limit,
                 single_buffer_anchor):
    c = feat.shape[-1]
    grid = (b // tb, hw // thw)
    kernel = functools.partial(classifier_kernel, hw=hw, num_classes=nc)

    if single_buffer_anchor:
        # Grid-invariant anchors: one resident buffer is enough (halves the
        # resident VMEM for large NC*C anchor matrices).
        anchor_spec = pl.BlockSpec((c, nc), lambda i, k: (0, 0),
                                   pipeline_mode=pl.Buffered(1))
    else:
        anchor_spec = pl.BlockSpec((c, nc), lambda i, k: (0, 0))

    return pl.pallas_call(
        kernel,
        grid_spec=pltpu.PrefetchScalarGridSpec(
            num_scalar_prefetch=0,
            grid=grid,
            in_specs=[
                pl.BlockSpec((tb, thw, c), lambda i, k: (i, k, 0)),
                anchor_spec,
                pl.BlockSpec((tb, nc), lambda i, k: (i, 0)),
            ],
            out_specs=(
                pl.BlockSpec((tb, 1), lambda i, k: (i, 0)),
                pl.BlockSpec((tb, 1), lambda i, k: (i, 0)),
            ),
            scratch_shapes=[pltpu.VMEM((tb, c), jnp.float32)],
        ),
        out_shape=(
            jax.ShapeDtypeStruct((b, 1), jnp.float32),
            jax.ShapeDtypeStruct((b, 1), jnp.int32),
        ),
        compiler_params=pltpu.CompilerParams(
            dimension_semantics=("parallel", "arbitrary"),
            vmem_limit_bytes=int(vmem_limit),
        ),
    )(feat, a_t, y_f32)


def classifier_forward(feat_nchw, anchor, y, *, feat_dtype=None):
    """feat_nchw: (B, C, H, W) backbone output; anchor: (NC, C); y: (B, NC).

    feat_dtype: optionally stream features in a narrower dtype (e.g.
    jnp.bfloat16 on v6e/v7x -- kernel is HBM-bound on the feat stream);
    accumulation in the kernel is always f32.
    """
    b, c, h, w = feat_nchw.shape
    hw = h * w
    nc = anchor.shape[0]

    # Lane-dense layout: channels on lanes.  The ResNet-head spatial map is
    # tiny, so this wrapper transpose is cheap and buys dense vregs,
    # contiguous C-major DMA rows and a VPU/sublane pooling reduce.
    feat = jnp.transpose(feat_nchw, (0, 2, 3, 1)).reshape(b, hw, c)
    if feat_dtype is not None:
        feat = feat.astype(feat_dtype)

    # Hoist anchor L2-normalization out of the kernel and pre-transpose to
    # (C, NC) so the in-kernel contraction needs no XLU transpose.
    a_f32 = anchor.astype(jnp.float32)
    a_norm = a_f32 / (
        jnp.sqrt(jnp.sum(a_f32 * a_f32, axis=1, keepdims=True)) + ESP)
    a_t = a_norm.T                                                    # (C, NC)

    itemsize = jnp.dtype(feat.dtype).itemsize
    cap = _vmem_cap_bytes()
    tb = _pick_batch_tile(b)
    thw = _pick_spatial_tile(hw, tb, c, itemsize,
                             budget=min(cap // 2, 24 * 1024 * 1024))

    # VMEM budget from *padded* physical tile sizes (lane->128, sublane->8/16).
    feat_bytes = 2 * _padded_feat_tile_bytes(tb, thw, c, itemsize)
    anchor_bytes = 2 * _round_up(c, 8) * _round_up(nc, 128) * 4
    y_bytes = 2 * _round_up(tb, 8) * _round_up(nc, 128) * 4
    acc_bytes = _round_up(tb, 8) * _round_up(c, 128) * 4
    out_bytes = 4 * _round_up(tb, 8) * 128 * 4
    required = feat_bytes + anchor_bytes + y_bytes + acc_bytes + out_bytes
    vmem_limit = min(cap, max(32 * 1024 * 1024,
                              int(required * 1.5) + 4 * 1024 * 1024))

    y_f32 = y.astype(jnp.float32)
    call = functools.partial(_call_kernel, feat, a_t, y_f32, b=b, hw=hw, nc=nc,
                             tb=tb, thw=thw, vmem_limit=vmem_limit)
    try:
        loss_pe, pred = call(single_buffer_anchor=True)
    except Exception:
        # Fallback for JAX versions without pipeline_mode / pl.Buffered support.
        loss_pe, pred = call(single_buffer_anchor=False)

    # Mean over the *global* batch (kernel emits per-example losses so the
    # batch grid axis stays parallel-safe).
    loss = jnp.sum(loss_pe) / jnp.float32(b)
    return loss, pred[:, 0]


def _reference(feat_nchw, anchor, y):
    pooled = jnp.mean(feat_nchw, axis=(2, 3))
    xn = pooled / (jnp.linalg.norm(pooled, axis=1, keepdims=True) + ESP)
    an = anchor / (jnp.linalg.norm(anchor, axis=1, keepdims=True) + ESP)
    dist = (xn @ an.T + 1.0) / 2.0
    pos_cnt = y.sum(1) + ESP
    neg_cnt = (1 - y).sum(1) + ESP
    pos_loss = -(y * jnp.log(K * dist + B_CONST)).sum(1) / pos_cnt
    neg_loss = -((1 - y) * jnp.log(1 - K * dist)).sum(1) / neg_cnt
    return (pos_loss + neg_loss).mean(), jnp.argmax(dist, axis=1)


if __name__ == "__main__":
    # Small shapes: batch=2, feat_dim=128 (stand-in for expansion*512),
    # spatial=4x4 backbone feature map, num_classes=8.
    B, C, H, W = 2, 128, 4, 4
    NUM_CLASSES = 8

    key = jax.random.PRNGKey(0)
    k_feat, k_anchor, k_y = jax.random.split(key, 3)

    feat = jax.random.normal(k_feat, (B, C, H, W), dtype=jnp.float32)
    anchor = jax.random.normal(k_anchor, (NUM_CLASSES, C), dtype=jnp.float32)
    y = (jax.random.uniform(k_y, (B, NUM_CLASSES)) > 0.5).astype(jnp.float32)

    # f32 streaming in the demo so numerics match the f32 reference exactly;
    # pass feat_dtype=jnp.bfloat16 to halve HBM traffic on v6e/v7x.
    loss, pred = classifier_forward(feat, anchor, y)
    loss = jax.block_until_ready(loss)
    pred = jax.block_until_ready(pred)

    ref_loss, ref_pred = _reference(feat, anchor, y)
    assert jnp.allclose(loss, ref_loss, rtol=1e-5, atol=1e-5), (loss, ref_loss)
    assert jnp.array_equal(pred, ref_pred.astype(jnp.int32)), (pred, ref_pred)

    print("KERNEL_OK")
</pallas_src>

<mosaic_0001>
module attributes {stable_mosaic.version = 11 : i64} {
  func.func @classifier_kernel(%arg0: i32, %arg1: i32, %arg2: memref<2x16x128xf32, #tpu.memory_space<vmem>>, %arg3: memref<128x8xf32, #tpu.memory_space<vmem>>, %arg4: memref<2x8xf32, #tpu.memory_space<vmem>>, %arg5: memref<2x1xf32, #tpu.memory_space<vmem>>, %arg6: memref<2x1xi32, #tpu.memory_space<vmem>>, %arg7: memref<2x128xf32, #tpu.memory_space<vmem>>) attributes {dimension_semantics = [#tpu.dimension_semantics<parallel>, #tpu.dimension_semantics<arbitrary>], iteration_bounds = array<i64: 1, 1>, scalar_prefetch = 0 : i64, scratch_operands = 1 : i64, tpu.core_type = #tpu.core_type<tc>, window_params = [{transform_indices = @transform_0, window_bounds = array<i64: 2, 16, 128>}, {pipeline_mode = #tpu.pipeline_mode<synchronous>, transform_indices = @transform_1, window_bounds = array<i64: 128, 8>}, {transform_indices = @transform_2, window_bounds = array<i64: 2, 8>}, {transform_indices = @transform_3, window_bounds = array<i64: 2, 1>}, {transform_indices = @transform_4, window_bounds = array<i64: 2, 1>}]} {
    %c0_i32 = arith.constant 0 : i32
    %0 = arith.cmpi eq, %arg1, %c0_i32 : i32
    %1 = arith.extui %0 : i1 to i32
    %c0_i32_0 = arith.constant 0 : i32
    %2 = arith.cmpi ne, %1, %c0_i32_0 : i32
    scf.if %2 {
      %cst_9 = arith.constant 0.000000e+00 : f32
      %11 = vector.broadcast %cst_9 : f32 to vector<2x128xf32>
      %c0_10 = arith.constant 0 : index
      %c0_11 = arith.constant 0 : index
      %12 = vector.load %arg7[%c0_10, %c0_11] : memref<2x128xf32, #tpu.memory_space<vmem>>, vector<2x128xf32>
      tpu.vector_store %arg7[%c0_10, %c0_11], %11 {strides = array<i32>} : memref<2x128xf32, #tpu.memory_space<vmem>>, vector<2x128xf32>,
    } else {
    }
    %c0 = arith.constant 0 : index
    %c0_1 = arith.constant 0 : index
    %3 = vector.load %arg7[%c0, %c0_1] : memref<2x128xf32, #tpu.memory_space<vmem>>, vector<2x128xf32>
    %c0_2 = arith.constant 0 : index
    %c0_3 = arith.constant 0 : index
    %c0_4 = arith.constant 0 : index
    %4 = vector.load %arg2[%c0_2, %c0_3, %c0_4] : memref<2x16x128xf32, #tpu.memory_space<vmem>>, vector<2x16x128xf32>
    %cst = arith.constant dense<0.000000e+00> : vector<2x128xf32>
    %5 = vector.multi_reduction <add>, %4, %cst [1] : vector<2x16x128xf32> to vector<2x128xf32>
    %6 = arith.addf %3, %5 : vector<2x128xf32>
    %c0_5 = arith.constant 0 : index
    %c0_6 = arith.constant 0 : index
    %7 = vector.load %arg7[%c0_5, %c0_6] : memref<2x128xf32, #tpu.memory_space<vmem>>, vector<2x128xf32>
    tpu.vector_store %arg7[%c0_5, %c0_6], %6 {strides = array<i32>} : memref<2x128xf32, #tpu.memory_space<vmem>>, vector<2x128xf32>,
    %c0_i32_7 = arith.constant 0 : i32
    %8 = arith.cmpi eq, %arg1, %c0_i32_7 : i32
    %9 = arith.extui %8 : i1 to i32
    %c0_i32_8 = arith.constant 0 : i32
    %10 = arith.cmpi ne, %9, %c0_i32_8 : i32
    scf.if %10 {
      %c0_9 = arith.constant 0 : index
      %c0_10 = arith.constant 0 : index
      %11 = vector.load %arg7[%c0_9, %c0_10] : memref<2x128xf32, #tpu.memory_space<vmem>>, vector<2x128xf32>
      %cst_11 = arith.constant 6.250000e-02 : f32
      %12 = vector.broadcast %cst_11 : f32 to vector<2x128xf32>
      %13 = arith.mulf %11, %12 : vector<2x128xf32>
      %14 = arith.mulf %13, %13 : vector<2x128xf32>
      %cst_12 = arith.constant dense<0.000000e+00> : vector<2xf32>
      %15 = vector.multi_reduction <add>, %14, %cst_12 [1] : vector<2x128xf32> to vector<2xf32>
      %16 = vector.shape_cast %15 : vector<2xf32> to vector<2x1xf32>
      %17 = math.sqrt %16 : vector<2x1xf32>
      %cst_13 = arith.constant 9.99999974E-6 : f32
      %18 = vector.broadcast %cst_13 : f32 to vector<2x1xf32>
      %19 = arith.addf %17, %18 : vector<2x1xf32>
      %20 = tpu.reciprocal %19 : vector<2x1xf32> -> vector<2x1xf32>
      %21 = vector.broadcast %20 : vector<2x1xf32> to vector<2x128xf32>
      %22 = arith.mulf %13, %21 : vector<2x128xf32>
      %c0_14 = arith.constant 0 : index
      %c0_15 = arith.constant 0 : index
      %23 = vector.load %arg3[%c0_14, %c0_15] : memref<128x8xf32, #tpu.memory_space<vmem>>, vector<128x8xf32>
      %cst_16 = arith.constant dense<0.000000e+00> : vector<2x8xf32>
      %24 = tpu.matmul %22, %23, %cst_16 {dimension_numbers = #tpu.dot_dimension_numbers<[1], [0], [0], [1], [0, 0, 1, 1], [], []>} : vector<2x128xf32>, vector<128x8xf32>, vector<2x8xf32> -> vector<2x8xf32>
      %cst_17 = arith.constant 1.000000e+00 : f32
      %25 = vector.broadcast %cst_17 : f32 to vector<2x8xf32>
      %26 = arith.addf %24, %25 : vector<2x8xf32>
      %cst_18 = arith.constant 5.000000e-01 : f32
      %27 = vector.broadcast %cst_18 : f32 to vector<2x8xf32>
      %28 = arith.mulf %26, %27 : vector<2x8xf32>
      %cst_19 = arith.constant 0.000000e+00 : f32
      %cst_20 = arith.constant 1.000000e+00 : f32
      %29 = vector.broadcast %cst_19 : f32 to vector<2x8xf32>
      %30 = arith.maximumf %29, %28 : vector<2x8xf32>
      %31 = vector.broadcast %cst_20 : f32 to vector<2x8xf32>
      %32 = arith.minimumf %31, %30 : vector<2x8xf32>
      %c0_21 = arith.constant 0 : index
      %c0_22 = arith.constant 0 : index
      %33 = vector.load %arg4[%c0_21, %c0_22] : memref<2x8xf32, #tpu.memory_space<vmem>>, vector<2x8xf32>
      %cst_23 = arith.constant dense<0.000000e+00> : vector<2xf32>
      %34 = vector.multi_reduction <add>, %33, %cst_23 [1] : vector<2x8xf32> to vector<2xf32>
      %35 = vector.shape_cast %34 : vector<2xf32> to vector<2x1xf32>
      %cst_24 = arith.constant 9.99999974E-6 : f32
      %36 = vector.broadcast %cst_24 : f32 to vector<2x1xf32>
      %37 = arith.addf %35, %36 : vector<2x1xf32>
      %38 = tpu.reciprocal %37 : vector<2x1xf32> -> vector<2x1xf32>
      %cst_25 = arith.constant 1.000000e+00 : f32
      %39 = vector.broadcast %cst_25 : f32 to vector<2x8xf32>
      %40 = arith.subf %39, %33 : vector<2x8xf32>
      %cst_26 = arith.constant dense<0.000000e+00> : vector<2xf32>
      %41 = vector.multi_reduction <add>, %40, %cst_26 [1] : vector<2x8xf32> to vector<2xf32>
      %42 = vector.shape_cast %41 : vector<2xf32> to vector<2x1xf32>
      %cst_27 = arith.constant 9.99999974E-6 : f32
      %43 = vector.broadcast %cst_27 : f32 to vector<2x1xf32>
      %44 = arith.addf %42, %43 : vector<2x1xf32>
      %45 = tpu.reciprocal %44 : vector<2x1xf32> -> vector<2x1xf32>
      %cst_28 = arith.constant 9.900000e-01 : f32
      %46 = vector.broadcast %cst_28 : f32 to vector<2x8xf32>
      %47 = arith.mulf %46, %32 : vector<2x8xf32>
      %cst_29 = arith.constant 0.00999999977 : f32
      %48 = vector.broadcast %cst_29 : f32 to vector<2x8xf32>
      %49 = arith.addf %47, %48 : vector<2x8xf32>
      %50 = math.log %49 : vector<2x8xf32>
      %51 = arith.mulf %33, %50 : vector<2x8xf32>
      %cst_30 = arith.constant dense<0.000000e+00> : vector<2xf32>
      %52 = vector.multi_reduction <add>, %51, %cst_30 [1] : vector<2x8xf32> to vector<2xf32>
      %53 = vector.shape_cast %52 : vector<2xf32> to vector<2x1xf32>
      %cst_31 = arith.constant 0.000000e+00 : f32
      %54 = vector.broadcast %cst_31 : f32 to vector<2x1xf32>
      %55 = arith.subf %54, %53 : vector<2x1xf32>
      %56 = arith.mulf %55, %38 : vector<2x1xf32>
      %cst_32 = arith.constant 1.000000e+00 : f32
      %57 = vector.broadcast %cst_32 : f32 to vector<2x8xf32>
      %58 = arith.subf %57, %33 : vector<2x8xf32>
      %cst_33 = arith.constant 9.900000e-01 : f32
      %59 = vector.broadcast %cst_33 : f32 to vector<2x8xf32>
      %60 = arith.mulf %59, %32 : vector<2x8xf32>
      %cst_34 = arith.constant 1.000000e+00 : f32
      %61 = vector.broadcast %cst_34 : f32 to vector<2x8xf32>
      %62 = arith.subf %61, %60 : vector<2x8xf32>
      %63 = math.log %62 : vector<2x8xf32>
      %64 = arith.mulf %58, %63 : vector<2x8xf32>
      %cst_35 = arith.constant dense<0.000000e+00> : vector<2xf32>
      %65 = vector.multi_reduction <add>, %64, %cst_35 [1] : vector<2x8xf32> to vector<2xf32>
      %66 = vector.shape_cast %65 : vector<2xf32> to vector<2x1xf32>
      %cst_36 = arith.constant 0.000000e+00 : f32
      %67 = vector.broadcast %cst_36 : f32 to vector<2x1xf32>
      %68 = arith.subf %67, %66 : vector<2x1xf32>
      %69 = arith.mulf %68, %45 : vector<2x1xf32>
      %70 = arith.addf %56, %69 : vector<2x1xf32>
      %c0_37 = arith.constant 0 : index
      %c0_38 = arith.constant 0 : index
      %71 = vector.load %arg5[%c0_37, %c0_38] : memref<2x1xf32, #tpu.memory_space<vmem>>, vector<2x1xf32>
      tpu.vector_store %arg5[%c0_37, %c0_38], %70 {strides = array<i32>} : memref<2x1xf32, #tpu.memory_space<vmem>>, vector<2x1xf32>,
      %cst_39 = arith.constant dense<0xFF800000> : vector<2xf32>
      %72 = vector.multi_reduction <maximumf>, %32, %cst_39 [1] : vector<2x8xf32> to vector<2xf32>
      %73 = vector.shape_cast %72 : vector<2xf32> to vector<2x1xf32>
      %74 = tpu.iota {dimensions = array<i32: 1>} : vector<2x8xi32>
      %75 = vector.broadcast %73 : vector<2x1xf32> to vector<2x8xf32>
      %76 = arith.cmpf oeq, %32, %75 : vector<2x8xf32>
      %c8_i32 = arith.constant 8 : i32
      %77 = vector.broadcast %c8_i32 : i32 to vector<2x8xi32>
      %78 = arith.select %76, %74, %77 : vector<2x8xi1>, vector<2x8xi32>
      %cst_40 = arith.constant dense<2147483647> : vector<2xi32>
      %79 = vector.multi_reduction <minsi>, %78, %cst_40 [1] : vector<2x8xi32> to vector<2xi32>
      %80 = vector.shape_cast %79 : vector<2xi32> to vector<2x1xi32>
      %c0_41 = arith.constant 0 : index
      %c0_42 = arith.constant 0 : index
      %81 = vector.load %arg6[%c0_41, %c0_42] : memref<2x1xi32, #tpu.memory_space<vmem>>, vector<2x1xi32>
      tpu.vector_store %arg6[%c0_41, %c0_42], %80 {strides = array<i32>} : memref<2x1xi32, #tpu.memory_space<vmem>>, vector<2x1xi32>,
    } else {
    }
    return
  }
  func.func @transform_0(%arg0: i32, %arg1: i32) -> (i32, i32, i32) {
    %c0_i32 = arith.constant 0 : i32
    %c0_i32_0 = arith.constant 0 : i32
    return %arg0, %arg1, %c0_i32 : i32, i32, i32
  }
  func.func @transform_1(%arg0: i32, %arg1: i32) -> (i32, i32) {
    %c0_i32 = arith.constant 0 : i32
    %c0_i32_0 = arith.constant 0 : i32
    %c0_i32_1 = arith.constant 0 : i32
    return %c0_i32, %c0_i32_0 : i32, i32
  }
  func.func @transform_2(%arg0: i32, %arg1: i32) -> (i32, i32) {
    %c0_i32 = arith.constant 0 : i32
    %c0_i32_0 = arith.constant 0 : i32
    return %arg0, %c0_i32 : i32, i32
  }
  func.func @transform_3(%arg0: i32, %arg1: i32) -> (i32, i32) {
    %c0_i32 = arith.constant 0 : i32
    %c0_i32_0 = arith.constant 0 : i32
    return %arg0, %c0_i32 : i32, i32
  }
  func.func @transform_4(%arg0: i32, %arg1: i32) -> (i32, i32) {
    %c0_i32 = arith.constant 0 : i32
    %c0_i32_0 = arith.constant 0 : i32
    return %arg0, %c0_i32 : i32, i32
  }
}

module attributes {stable_mosaic.version = 11 : i64} {
  func.func @classifier_kernel(%arg0: i32, %arg1: i32, %arg2: memref<2x16x128xf32, #tpu.memory_space<vmem>>, %arg3: memref<128x8xf32, #tpu.memory_space<vmem>>, %arg4: memref<2x8xf32, #tpu.memory_space<vmem>>, %arg5: memref<2x1xf32, #tpu.memory_space<vmem>>, %arg6: memref<2x1xi32, #tpu.memory_space<vmem>>, %arg7: memref<2x128xf32, #tpu.memory_space<vmem>>) attributes {dimension_semantics = [#tpu.dimension_semantics<parallel>, #tpu.dimension_semantics<arbitrary>], iteration_bounds = array<i64: 1, 1>, scalar_prefetch = 0 : i64, scratch_operands = 1 : i64, tpu.core_type = #tpu.core_type<tc>, window_params = [{transform_indices = @transform_0, window_bounds = array<i64: 2, 16, 128>}, {pipeline_mode = #tpu.pipeline_mode<synchronous>, transform_indices = @transform_1, window_bounds = array<i64: 128, 8>}, {transform_indices = @transform_2, window_bounds = array<i64: 2, 8>}, {transform_indices = @transform_3, window_bounds = array<i64: 2, 1>}, {transform_indices = @transform_4, window_bounds = array<i64: 2, 1>}]} {
    %c0_i32 = arith.constant 0 : i32
    %0 = arith.cmpi eq, %arg1, %c0_i32 : i32
    %1 = arith.extui %0 : i1 to i32
    %c0_i32_0 = arith.constant 0 : i32
    %2 = arith.cmpi ne, %1, %c0_i32_0 : i32
    scf.if %2 {
      %cst_9 = arith.constant 0.000000e+00 : f32
      %11 = vector.broadcast %cst_9 : f32 to vector<2x128xf32>
      %c0_10 = arith.constant 0 : index
      %c0_11 = arith.constant 0 : index
      %12 = vector.load %arg7[%c0_10, %c0_11] : memref<2x128xf32, #tpu.memory_space<vmem>>, vector<2x128xf32>
      tpu.vector_store %arg7[%c0_10, %c0_11], %11 {strides = array<i32>} : memref<2x128xf32, #tpu.memory_space<vmem>>, vector<2x128xf32>,
    } else {
    }
    %c0 = arith.constant 0 : index
    %c0_1 = arith.constant 0 : index
    %3 = vector.load %arg7[%c0, %c0_1] : memref<2x128xf32, #tpu.memory_space<vmem>>, vector<2x128xf32>
    %c0_2 = arith.constant 0 : index
    %c0_3 = arith.constant 0 : index
    %c0_4 = arith.constant 0 : index
    %4 = vector.load %arg2[%c0_2, %c0_3, %c0_4] : memref<2x16x128xf32, #tpu.memory_space<vmem>>, vector<2x16x128xf32>
    %cst = arith.constant dense<0.000000e+00> : vector<2x128xf32>
    %5 = vector.multi_reduction <add>, %4, %cst [1] : vector<2x16x128xf32> to vector<2x128xf32>
    %6 = arith.addf %3, %5 : vector<2x128xf32>
    %c0_5 = arith.constant 0 : index
    %c0_6 = arith.constant 0 : index
    %7 = vector.load %arg7[%c0_5, %c0_6] : memref<2x128xf32, #tpu.memory_space<vmem>>, vector<2x128xf32>
    tpu.vector_store %arg7[%c0_5, %c0_6], %6 {strides = array<i32>} : memref<2x128xf32, #tpu.memory_space<vmem>>, vector<2x128xf32>,
    %c0_i32_7 = arith.constant 0 : i32
    %8 = arith.cmpi eq, %arg1, %c0_i32_7 : i32
    %9 = arith.extui %8 : i1 to i32
    %c0_i32_8 = arith.constant 0 : i32
    %10 = arith.cmpi ne, %9, %c0_i32_8 : i32
    scf.if %10 {
      %c0_9 = arith.constant 0 : index
      %c0_10 = arith.constant 0 : index
      %11 = vector.load %arg7[%c0_9, %c0_10] : memref<2x128xf32, #tpu.memory_space<vmem>>, vector<2x128xf32>
      %cst_11 = arith.constant 6.250000e-02 : f32
      %12 = vector.broadcast %cst_11 : f32 to vector<2x128xf32>
      %13 = arith.mulf %11, %12 : vector<2x128xf32>
      %14 = arith.mulf %13, %13 : vector<2x128xf32>
      %cst_12 = arith.constant dense<0.000000e+00> : vector<2xf32>
      %15 = vector.multi_reduction <add>, %14, %cst_12 [1] : vector<2x128xf32> to vector<2xf32>
      %16 = vector.shape_cast %15 : vector<2xf32> to vector<2x1xf32>
      %17 = math.sqrt %16 : vector<2x1xf32>
      %cst_13 = arith.constant 9.99999974E-6 : f32
      %18 = vector.broadcast %cst_13 : f32 to vector<2x1xf32>
      %19 = arith.addf %17, %18 : vector<2x1xf32>
      %20 = tpu.reciprocal %19 : vector<2x1xf32> -> vector<2x1xf32>
      %21 = vector.broadcast %20 : vector<2x1xf32> to vector<2x128xf32>
      %22 = arith.mulf %13, %21 : vector<2x128xf32>
      %c0_14 = arith.constant 0 : index
      %c0_15 = arith.constant 0 : index
      %23 = vector.load %arg3[%c0_14, %c0_15] : memref<128x8xf32, #tpu.memory_space<vmem>>, vector<128x8xf32>
      %cst_16 = arith.constant dense<0.000000e+00> : vector<2x8xf32>
      %24 = tpu.matmul %22, %23, %cst_16 {dimension_numbers = #tpu.dot_dimension_numbers<[1], [0], [0], [1], [0, 0, 1, 1], [], []>} : vector<2x128xf32>, vector<128x8xf32>, vector<2x8xf32> -> vector<2x8xf32>
      %cst_17 = arith.constant 1.000000e+00 : f32
      %25 = vector.broadcast %cst_17 : f32 to vector<2x8xf32>
      %26 = arith.addf %24, %25 : vector<2x8xf32>
      %cst_18 = arith.constant 5.000000e-01 : f32
      %27 = vector.broadcast %cst_18 : f32 to vector<2x8xf32>
      %28 = arith.mulf %26, %27 : vector<2x8xf32>
      %cst_19 = arith.constant 0.000000e+00 : f32
      %cst_20 = arith.constant 1.000000e+00 : f32
      %29 = vector.broadcast %cst_19 : f32 to vector<2x8xf32>
      %30 = arith.maximumf %29, %28 : vector<2x8xf32>
      %31 = vector.broadcast %cst_20 : f32 to vector<2x8xf32>
      %32 = arith.minimumf %31, %30 : vector<2x8xf32>
      %c0_21 = arith.constant 0 : index
      %c0_22 = arith.constant 0 : index
      %33 = vector.load %arg4[%c0_21, %c0_22] : memref<2x8xf32, #tpu.memory_space<vmem>>, vector<2x8xf32>
      %cst_23 = arith.constant dense<0.000000e+00> : vector<2xf32>
      %34 = vector.multi_reduction <add>, %33, %cst_23 [1] : vector<2x8xf32> to vector<2xf32>
      %35 = vector.shape_cast %34 : vector<2xf32> to vector<2x1xf32>
      %cst_24 = arith.constant 9.99999974E-6 : f32
      %36 = vector.broadcast %cst_24 : f32 to vector<2x1xf32>
      %37 = arith.addf %35, %36 : vector<2x1xf32>
      %38 = tpu.reciprocal %37 : vector<2x1xf32> -> vector<2x1xf32>
      %cst_25 = arith.constant 1.000000e+00 : f32
      %39 = vector.broadcast %cst_25 : f32 to vector<2x8xf32>
      %40 = arith.subf %39, %33 : vector<2x8xf32>
      %cst_26 = arith.constant dense<0.000000e+00> : vector<2xf32>
      %41 = vector.multi_reduction <add>, %40, %cst_26 [1] : vector<2x8xf32> to vector<2xf32>
      %42 = vector.shape_cast %41 : vector<2xf32> to vector<2x1xf32>
      %cst_27 = arith.constant 9.99999974E-6 : f32
      %43 = vector.broadcast %cst_27 : f32 to vector<2x1xf32>
      %44 = arith.addf %42, %43 : vector<2x1xf32>
      %45 = tpu.reciprocal %44 : vector<2x1xf32> -> vector<2x1xf32>
      %cst_28 = arith.constant 9.900000e-01 : f32
      %46 = vector.broadcast %cst_28 : f32 to vector<2x8xf32>
      %47 = arith.mulf %46, %32 : vector<2x8xf32>
      %cst_29 = arith.constant 0.00999999977 : f32
      %48 = vector.broadcast %cst_29 : f32 to vector<2x8xf32>
      %49 = arith.addf %47, %48 : vector<2x8xf32>
      %50 = math.log %49 : vector<2x8xf32>
      %51 = arith.mulf %33, %50 : vector<2x8xf32>
      %cst_30 = arith.constant dense<0.000000e+00> : vector<2xf32>
      %52 = vector.multi_reduction <add>, %51, %cst_30 [1] : vector<2x8xf32> to vector<2xf32>
      %53 = vector.shape_cast %52 : vector<2xf32> to vector<2x1xf32>
      %cst_31 = arith.constant 0.000000e+00 : f32
      %54 = vector.broadcast %cst_31 : f32 to vector<2x1xf32>
      %55 = arith.subf %54, %53 : vector<2x1xf32>
      %56 = arith.mulf %55, %38 : vector<2x1xf32>
      %cst_32 = arith.constant 1.000000e+00 : f32
      %57 = vector.broadcast %cst_32 : f32 to vector<2x8xf32>
      %58 = arith.subf %57, %33 : vector<2x8xf32>
      %cst_33 = arith.constant 9.900000e-01 : f32
      %59 = vector.broadcast %cst_33 : f32 to vector<2x8xf32>
      %60 = arith.mulf %59, %32 : vector<2x8xf32>
      %cst_34 = arith.constant 1.000000e+00 : f32
      %61 = vector.broadcast %cst_34 : f32 to vector<2x8xf32>
      %62 = arith.subf %61, %60 : vector<2x8xf32>
      %63 = math.log %62 : vector<2x8xf32>
      %64 = arith.mulf %58, %63 : vector<2x8xf32>
      %cst_35 = arith.constant dense<0.000000e+00> : vector<2xf32>
      %65 = vector.multi_reduction <add>, %64, %cst_35 [1] : vector<2x8xf32> to vector<2xf32>
      %66 = vector.shape_cast %65 : vector<2xf32> to vector<2x1xf32>
      %cst_36 = arith.constant 0.000000e+00 : f32
      %67 = vector.broadcast %cst_36 : f32 to vector<2x1xf32>
      %68 = arith.subf %67, %66 : vector<2x1xf32>
      %69 = arith.mulf %68, %45 : vector<2x1xf32>
      %70 = arith.addf %56, %69 : vector<2x1xf32>
      %c0_37 = arith.constant 0 : index
      %c0_38 = arith.constant 0 : index
      %71 = vector.load %arg5[%c0_37, %c0_38] : memref<2x1xf32, #tpu.memory_space<vmem>>, vector<2x1xf32>
      tpu.vector_store %arg5[%c0_37, %c0_38], %70 {strides = array<i32>} : memref<2x1xf32, #tpu.memory_space<vmem>>, vector<2x1xf32>,
      %cst_39 = arith.constant dense<0xFF800000> : vector<2xf32>
      %72 = vector.multi_reduction <maximumf>, %32, %cst_39 [1] : vector<2x8xf32> to vector<2xf32>
      %73 = vector.shape_cast %72 : vector<2xf32> to vector<2x1xf32>
      %74 = tpu.iota {dimensions = array<i32: 1>} : vector<2x8xi32>
      %75 = vector.broadcast %73 : vector<2x1xf32> to vector<2x8xf32>
      %76 = arith.cmpf oeq, %32, %75 : vector<2x8xf32>
      %c8_i32 = arith.constant 8 : i32
      %77 = vector.broadcast %c8_i32 : i32 to vector<2x8xi32>
      %78 = arith.select %76, %74, %77 : vector<2x8xi1>, vector<2x8xi32>
      %cst_40 = arith.constant dense<2147483647> : vector<2xi32>
      %79 = vector.multi_reduction <minsi>, %78, %cst_40 [1] : vector<2x8xi32> to vector<2xi32>
      %80 = vector.shape_cast %79 : vector<2xi32> to vector<2x1xi32>
      %c0_41 = arith.constant 0 : index
      %c0_42 = arith.constant 0 : index
      %81 = vector.load %arg6[%c0_41, %c0_42] : memref<2x1xi32, #tpu.memory_space<vmem>>, vector<2x1xi32>
      tpu.vector_store %arg6[%c0_41, %c0_42], %80 {strides = array<i32>} : memref<2x1xi32, #tpu.memory_space<vmem>>, vector<2x1xi32>,
    } else {
    }
    return
  }
  func.func @transform_0(%arg0: i32, %arg1: i32) -> (i32, i32, i32) {
    %c0_i32 = arith.constant 0 : i32
    %c0_i32_0 = arith.constant 0 : i32
    return %arg0, %arg1, %c0_i32 : i32, i32, i32
  }
  func.func @transform_1(%arg0: i32, %arg1: i32) -> (i32, i32) {
    %c0_i32 = arith.constant 0 : i32
    %c0_i32_0 = arith.constant 0 : i32
    %c0_i32_1 = arith.constant 0 : i32
    return %c0_i32, %c0_i32_0 : i32, i32
  }
  func.func @transform_2(%arg0: i32, %arg1: i32) -> (i32, i32) {
    %c0_i32 = arith.constant 0 : i32
    %c0_i32_0 = arith.constant 0 : i32
    return %arg0, %c0_i32 : i32, i32
  }
  func.func @transform_3(%arg0: i32, %arg1: i32) -> (i32, i32) {
    %c0_i32 = arith.constant 0 : i32
    %c0_i32_0 = arith.constant 0 : i32
    return %arg0, %c0_i32 : i32, i32
  }
  func.func @transform_4(%arg0: i32, %arg1: i32) -> (i32, i32) {
    %c0_i32 = arith.constant 0 : i32
    %c0_i32_0 = arith.constant 0 : i32
    return %arg0, %c0_i32 : i32, i32
  }
}

</mosaic_0001>

<llo_original>
// kernel: tpu_custom_call.1
$region0: #{tpu_custom_call.1}
  #allocation0 [shape = 'u32[]', space=smem, size = 0x4, offset = 0x4, fixed_abs, tag = 'smem constant byte address 0x4 - core index']
  #allocation1 [shape = 'u32[144,128]{1,0:T(1,128)}', space=vmem, size = 0x12000, scoped, tag = 'internal scratch']
  #allocation2 [shape = 'f32[2,128]{1,0:T(2,128)}', space=vmem, size = 0x400, scoped, tag = 'scratch operand']
  %s0 = inlined_call_operand.vmem [shape: f32[2,16,128], index: 0, kind: input, shape index: {}]
  %s1 = inlined_call_operand.vmem [shape: f32[128,8], index: 1, kind: input, shape index: {}]
  %s2 = inlined_call_operand.vmem [shape: f32[2,8], index: 2, kind: input, shape index: {}]
  %s3 = inlined_call_operand.vmem [shape: f32[2,1], index: 3, kind: output, shape index: {0}]
  %s4 = inlined_call_operand.vmem [shape: s32[2,1], index: 4, kind: output, shape index: {1}]
  %5 = xla_tuple %s3, %s4
  %s6 = sld [smem:[#allocation0]]
  $region38: #{tpu_custom_call.1} parent=0
    _
  %s8 = ssub.s32 1, %s6
  %s9 = scalar_select 0, %s8, %s6
  // Predicated region
  $region2: #{tpu_custom_call.1} parent=0 // pred_check
    _
  $region3: #{tpu_custom_call.1} parent=0 // pred_check_branch
    %11 = sbr.rel (0) target = $region5
  $region4: #{tpu_custom_call.1} parent=0 // pred_region
    _
  $region5: #{tpu_custom_call.1} parent=0 // pred_fallthru
    _
  // Predicated region
  $region6: #{tpu_custom_call.1} parent=0 // pred_check
    _
  $region7: #{tpu_custom_call.1} parent=0 // pred_check_branch
    %13 = sbr.rel (0) target = $region9
  $region8: #{tpu_custom_call.1} parent=0 // pred_region
    _
  $region9: #{tpu_custom_call.1} parent=0 // pred_fallthru
    _
  // Predicated region
  $region10: #{tpu_custom_call.1} parent=0 // pred_check
    _
  $region11: #{tpu_custom_call.1} parent=0 // pred_check_branch
    %15 = sbr.rel (0) target = $region13
  $region12: #{tpu_custom_call.1} parent=0 // pred_region
    _
  $region13: #{tpu_custom_call.1} parent=0 // pred_fallthru
    _
  %p16 = scmp.eq.s32.totalorder 0, 0
  // Predicated region
  $region14: #{tpu_custom_call.1} parent=0 // pred_check
    %p17 = pneg %p16
  $region15: #{tpu_custom_call.1} parent=0 // pred_check_branch
    %19 = sbr.rel (%p17) target = $region17
  $region16: #{tpu_custom_call.1} parent=0 // pred_region
    %20 = vst [vmem:[#allocation2] sm:$0x3] 0.0
  $region17: #{tpu_custom_call.1} parent=0 // pred_fallthru
    _
  %v21 = vld [vmem:[#allocation2] sm:$0x3]
  %v22 = vld [vmem:[%s0] sm:$0xff]
  %v23 = vld [vmem:[%s0 + $0x8] sm:$0xff]
  %v24 = vld [vmem:[%s0 + $0x10] sm:$0xff]
  %v25 = vld [vmem:[%s0 + $0x18] sm:$0xff]
  %v26 = vadd.f32 %v22, %v23
  %v27 = vrot.slane %v26, 4
  %v28 = vadd.f32 %v26, %v27
  %v29 = vrot.slane %v28, 2
  %v30 = vadd.f32 %v28, %v29
  %v31 = vrot.slane %v30, 1
  %v32 = vadd.f32 %v30, %v31
  %v33 = vadd.f32 %v24, %v25
  %v34 = vrot.slane %v33, 4
  %v35 = vadd.f32 %v33, %v34
  %v36 = vrot.slane %v35, 2
  %v37 = vadd.f32 %v35, %v36
  %v38 = vrot.slane %v37, 1
  %v39 = vadd.f32 %v37, %v38
  %vm42 = vcmask 1041409
  %v43 = vsel %vm42, %v39, %v32
  %v45 = vadd.f32 %v21, %v43
  %46 = vst [vmem:[#allocation2] sm:$0x3] %v45
  // Predicated region
  $region18: #{tpu_custom_call.1} parent=0 // pred_check
    %p47 = pneg %p16
  $region19: #{tpu_custom_call.1} parent=0 // pred_check_branch
    %49 = sbr.rel (%p47) target = $region21
  $region20: #{tpu_custom_call.1} parent=0 // pred_region
    %v50 = vld [vmem:[#allocation2] sm:$0x3]
    %v51 = vmul.f32 %v50, 0.0625
    %v52 = vmul.f32 %v51, %v51
    %vm53 = vcmask 1041408
    %v54 = vsel %vm53, %v52, 0.0
    %55 = vadd.xlane.f32.xlu0 %v54
    %v56 = vpop.xlane.xlu0 %55
    %v57 = vrsqrt.pop %v56
    %v58 = vmul.f32 %v56, %v57
    %vm59 = vcmp.eq.f32.partialorder %v56, inf
    %v60 = vsel %vm59, %v56, %v58
    %vm61 = vcmp.eq.f32.partialorder %v56, 0.0
    %v62 = vand.u32 %v56, 2147483648
    %v63 = vsel %vm61, %v62, %v60
    %v64 = vadd.f32 %v63, 1e-05
    %v65 = vrcp.pop %v64
    %v66 = vmul.f32 %v51, %v65
    %v67 = vld [vmem:[%s1] sm:$0xff]
    %v68 = vld [vmem:[%s1 + $0x8] sm:$0xff]
    %v69 = vld [vmem:[%s1 + $0x10] sm:$0xff]
    %v70 = vld [vmem:[%s1 + $0x18] sm:$0xff]
    %v71 = vld [vmem:[%s1 + $0x20] sm:$0xff]
    %v72 = vld [vmem:[%s1 + $0x28] sm:$0xff]
    %v73 = vld [vmem:[%s1 + $0x30] sm:$0xff]
    %v74 = vld [vmem:[%s1 + $0x38] sm:$0xff]
    %v75 = vld [vmem:[%s1 + $0x40] sm:$0xff]
    %v76 = vld [vmem:[%s1 + $0x48] sm:$0xff]
    %v77 = vld [vmem:[%s1 + $0x50] sm:$0xff]
    %v78 = vld [vmem:[%s1 + $0x58] sm:$0xff]
    %v79 = vld [vmem:[%s1 + $0x60] sm:$0xff]
    %v80 = vld [vmem:[%s1 + $0x68] sm:$0xff]
    %v81 = vld [vmem:[%s1 + $0x70] sm:$0xff]
    %v82 = vld [vmem:[%s1 + $0x78] sm:$0xff]
    %83 = vmatprep.subr.mxu0 0.0
    %84 = vmatpush1.msra.mxu0 %v67
    %85 = vmatprep.subr.mxu0 0.0
    %86 = vmatpush1.msra.mxu0 %v68
    %87 = vmatprep.subr.mxu0 0.0
    %88 = vmatpush1.msra.mxu0 %v69
    %89 = vmatprep.subr.mxu0 0.0
    %90 = vmatpush1.msra.mxu0 %v70
    %91 = vmatprep.subr.mxu0 0.0
    %92 = vmatpush1.msra.mxu0 %v71
    %93 = vmatprep.subr.mxu0 0.0
    %94 = vmatpush1.msra.mxu0 %v72
    %95 = vmatprep.subr.mxu0 0.0
    %96 = vmatpush1.msra.mxu0 %v73
    %97 = vmatprep.subr.mxu0 0.0
    %98 = vmatpush1.msra.mxu0 %v74
    %99 = vmatprep.subr.mxu0 0.0
    %100 = vmatpush1.msra.mxu0 %v75
    %101 = vmatprep.subr.mxu0 0.0
    %102 = vmatpush1.msra.mxu0 %v76
    %103 = vmatprep.subr.mxu0 0.0
    %104 = vmatpush1.msra.mxu0 %v77
    %105 = vmatprep.subr.mxu0 0.0
    %106 = vmatpush1.msra.mxu0 %v78
    %107 = vmatprep.subr.mxu0 0.0
    %108 = vmatpush1.msra.mxu0 %v79
    %109 = vmatprep.subr.mxu0 0.0
    %110 = vmatpush1.msra.mxu0 %v80
    %111 = vmatprep.subr.mxu0 0.0
    %112 = vmatpush1.msra.mxu0 %v81
    %113 = vmatprep.subr.mxu0 0.0
    %114 = vmatpush1.msra.mxu0 %v82
    %115 = vmatprep.subr.mxu0 0.0
    %116 = vmatpush1.msra.mxu0 0.0
    %117 = vmatprep.subr.mxu0 0.0
    %118 = vmatpush1.msra.mxu0 0.0
    %119 = vmatprep.subr.mxu0 0.0
    %120 = vmatpush1.msra.mxu0 0.0
    %121 = vmatprep.subr.mxu0 0.0
    %122 = vmatpush1.msra.mxu0 0.0
    %123 = vmatprep.subr.mxu0 0.0
    %124 = vmatpush1.msra.mxu0 0.0
    %125 = vmatprep.subr.mxu0 0.0
    %126 = vmatpush1.msra.mxu0 0.0
    %127 = vmatprep.subr.mxu0 0.0
    %128 = vmatpush1.msra.mxu0 0.0
    %129 = vmatprep.subr.mxu0 0.0
    %130 = vmatpush1.msra.mxu0 0.0
    %131 = vmatprep.subr.mxu0 0.0
    %132 = vmatpush1.msra.mxu0 0.0
    %133 = vmatprep.subr.mxu0 0.0
    %134 = vmatpush1.msra.mxu0 0.0
    %135 = vmatprep.subr.mxu0 0.0
    %136 = vmatpush1.msra.mxu0 0.0
    %137 = vmatprep.subr.mxu0 0.0
    %138 = vmatpush1.msra.mxu0 0.0
    %139 = vmatprep.subr.mxu0 0.0
    %140 = vmatpush1.msra.mxu0 0.0
    %141 = vmatprep.subr.mxu0 0.0
    %142 = vmatpush1.msra.mxu0 0.0
    %143 = vmatprep.subr.mxu0 0.0
    %144 = vmatpush1.msra.mxu0 0.0
    %145 = vmatprep.subr.mxu0 0.0
    %146 = vmatpush1.msra.mxu0 0.0
    %147 = vmatprep.mubr.f32.mxu0 0.0
    %148 = vmatmul.mubr.f32.gmra.mrb[0].mxu0 %v66
    %v149 = vpop.f32.mrb[0].mxu0
    %v150 = vadd.f32 1.0, %v149
    %v151 = vpop.f32.mrb[0].mxu0
    %152 = vdwg.mxu0
    %v153 = vmul.f32 %v150, 0.5
    %v154 = vmax.f32 %v153, 0.0
    %v155 = vmin.f32 %v154, 1.0
    %v156 = vld [vmem:[%s2] sm:$0x3]
    %vm157 = vcmask 58368
    %v158 = vsel %vm157, %v156, 0.0
    %159 = vadd.xlane.f32.xlu0 %v158
    %v160 = vpop.xlane.xlu0 %159
    %v161 = vadd.f32 %v160, 1e-05
    %v162 = vrcp.pop %v161
    %v163 = vsub.f32 1.0, %v156
    %v164 = vsel %vm157, %v163, 0.0
    %165 = vadd.xlane.f32.xlu0 %v164
    %v166 = vpop.xlane.xlu0 %165
    %v167 = vadd.f32 %v166, 1e-05
    %v168 = vrcp.pop %v167
    %v169 = vmul.f32 %v155, 0.99
    %v170 = vadd.f32 %v169, 0.01
    %v171 = vlog2.pop %v170
    %v172 = vmul.f32 %v171, 0.6931472
    %v173 = vmul.f32 %v156, %v172
    %v174 = vsel %vm157, %v173, 0.0
    %175 = vadd.xlane.f32.xlu0 %v174
    %v176 = vpop.xlane.xlu0 %175
    %v177 = vsub.f32 0.0, %v176
    %v178 = vmul.f32 %v177, %v162
    %v179 = vsub.f32 1.0, %v169
    %v180 = vlog2.pop %v179
    %v181 = vmul.f32 %v180, 0.6931472
    %v182 = vmul.f32 %v163, %v181
    %v183 = vsel %vm157, %v182, 0.0
    %184 = vadd.xlane.f32.xlu0 %v183
    %v185 = vpop.xlane.xlu0 %184
    %v186 = vsub.f32 0.0, %v185
    %v187 = vmul.f32 %v186, %v168
    %v188 = vadd.f32 %v178, %v187
    %vm189 = vcmask 1024
    %190 = vst.msk [vmem:[%s3] sm:$0x3] %vm189, %v188
    %v191 = vsel %vm157, %v155, -inf
    %192 = vmax.xlane.f32.xlu0 %v191
    %v193 = vpop.xlane.xlu0 %192
    %v194 = vlaneseq
    %v195 = vand.u32 %v194, 127
    %vm196 = vcmp.eq.f32.partialorder %v155, %v193
    %v197 = vsel %vm196, %v195, 8
    %v198 = vsel %vm157, %v197, 2147483647
    %v199 = vand.u32 %v198, 65535
    %v200 = vshra.s32 %v198, 16
    %v201 = vcvt.s32.f32 %v199
    %v202 = vcvt.s32.f32 %v200
    %203 = vmin.xlane.f32.xlu0 %v202
    %v204 = vpop.xlane.xlu0 %203
    %vm205 = vcmp.eq.f32.partialorder %v202, %v204
    %v206 = vsel %vm205, %v201, inf
    %207 = vmin.xlane.f32.xlu0 %v206
    %v208 = vpop.xlane.xlu0 %207
    %v209 = vcvt.f32.s32 %v208
    %v210 = vcvt.f32.s32 %v204
    %v211 = vshll.u32 %v210, 16
    %v212 = vadd.s32 %v211, %v209
    %213 = vst.msk [vmem:[%s4] sm:$0x3] %vm189, %v212
  $region21: #{tpu_custom_call.1} parent=0 // pred_fallthru
    _
  // Predicated region
  $region22: #{tpu_custom_call.1} parent=0 // pred_check
    _
  $region23: #{tpu_custom_call.1} parent=0 // pred_check_branch
    %215 = sbr.rel (0) target = $region25
  $region24: #{tpu_custom_call.1} parent=0 // pred_region
    _
  $region25: #{tpu_custom_call.1} parent=0 // pred_fallthru
    _
  // Predicated region
  $region26: #{tpu_custom_call.1} parent=0 // pred_check
    _
  $region27: #{tpu_custom_call.1} parent=0 // pred_check_branch
    %217 = sbr.rel (0) target = $region29
  $region28: #{tpu_custom_call.1} parent=0 // pred_region
    _
  $region29: #{tpu_custom_call.1} parent=0 // pred_fallthru
    _
  // Predicated region
  $region30: #{tpu_custom_call.1} parent=0 // pred_check
    _
  $region31: #{tpu_custom_call.1} parent=0 // pred_check_branch
    %219 = sbr.rel (0) target = $region33
  $region32: #{tpu_custom_call.1} parent=0 // pred_region
    _
  $region33: #{tpu_custom_call.1} parent=0 // pred_fallthru
    _
  // Predicated region
  $region34: #{tpu_custom_call.1} parent=0 // pred_check
    _
  $region35: #{tpu_custom_call.1} parent=0 // pred_check_branch
    %221 = sbr.rel (0) target = $region37
  $region36: #{tpu_custom_call.1} parent=0 // pred_region
    _
  $region37: #{tpu_custom_call.1} parent=0 // pred_fallthru
    _

// kernel: tpu_custom_call.1
$region0: #{tpu_custom_call.1}
  #allocation0 [shape = 'u32[]', space=smem, size = 0x4, offset = 0x4, fixed_abs, tag = 'smem constant byte address 0x4 - core index']
  #allocation1 [shape = 'u32[144,128]{1,0:T(1,128)}', space=vmem, size = 0x12000, scoped, tag = 'internal scratch']
  #allocation2 [shape = 'f32[2,128]{1,0:T(2,128)}', space=vmem, size = 0x400, scoped, tag = 'scratch operand']
  %s0 = inlined_call_operand.vmem [shape: f32[2,16,128], index: 0, kind: input, shape index: {}]
  %s1 = inlined_call_operand.vmem [shape: f32[128,8], index: 1, kind: input, shape index: {}]
  %s2 = inlined_call_operand.vmem [shape: f32[2,8], index: 2, kind: input, shape index: {}]
  %s3 = inlined_call_operand.vmem [shape: f32[2,1], index: 3, kind: output, shape index: {0}]
  %s4 = inlined_call_operand.vmem [shape: s32[2,1], index: 4, kind: output, shape index: {1}]
  %5 = xla_tuple %s3, %s4
  %s6 = sld [smem:[#allocation0]]
  $region38: #{tpu_custom_call.1} parent=0
    _
  %s8 = ssub.s32 1, %s6
  %s9 = scalar_select 0, %s8, %s6
  // Predicated region
  $region2: #{tpu_custom_call.1} parent=0 // pred_check
    _
  $region3: #{tpu_custom_call.1} parent=0 // pred_check_branch
    %11 = sbr.rel (0) target = $region5
  $region4: #{tpu_custom_call.1} parent=0 // pred_region
    _
  $region5: #{tpu_custom_call.1} parent=0 // pred_fallthru
    _
  // Predicated region
  $region6: #{tpu_custom_call.1} parent=0 // pred_check
    _
  $region7: #{tpu_custom_call.1} parent=0 // pred_check_branch
    %13 = sbr.rel (0) target = $region9
  $region8: #{tpu_custom_call.1} parent=0 // pred_region
    _
  $region9: #{tpu_custom_call.1} parent=0 // pred_fallthru
    _
  // Predicated region
  $region10: #{tpu_custom_call.1} parent=0 // pred_check
    _
  $region11: #{tpu_custom_call.1} parent=0 // pred_check_branch
    %15 = sbr.rel (0) target = $region13
  $region12: #{tpu_custom_call.1} parent=0 // pred_region
    _
  $region13: #{tpu_custom_call.1} parent=0 // pred_fallthru
    _
  %p16 = scmp.eq.s32.totalorder 0, 0
  // Predicated region
  $region14: #{tpu_custom_call.1} parent=0 // pred_check
    %p17 = pneg %p16
  $region15: #{tpu_custom_call.1} parent=0 // pred_check_branch
    %19 = sbr.rel (%p17) target = $region17
  $region16: #{tpu_custom_call.1} parent=0 // pred_region
    %20 = vst [vmem:[#allocation2] sm:$0x3] 0.0
  $region17: #{tpu_custom_call.1} parent=0 // pred_fallthru
    _
  %v21 = vld [vmem:[#allocation2] sm:$0x3]
  %v22 = vld [vmem:[%s0] sm:$0xff]
  %v23 = vld [vmem:[%s0 + $0x8] sm:$0xff]
  %v24 = vld [vmem:[%s0 + $0x10] sm:$0xff]
  %v25 = vld [vmem:[%s0 + $0x18] sm:$0xff]
  %v26 = vadd.f32 %v22, %v23
  %v27 = vrot.slane %v26, 4
  %v28 = vadd.f32 %v26, %v27
  %v29 = vrot.slane %v28, 2
  %v30 = vadd.f32 %v28, %v29
  %v31 = vrot.slane %v30, 1
  %v32 = vadd.f32 %v30, %v31
  %v33 = vadd.f32 %v24, %v25
  %v34 = vrot.slane %v33, 4
  %v35 = vadd.f32 %v33, %v34
  %v36 = vrot.slane %v35, 2
  %v37 = vadd.f32 %v35, %v36
  %v38 = vrot.slane %v37, 1
  %v39 = vadd.f32 %v37, %v38
  %vm42 = vcmask 1041409
  %v43 = vsel %vm42, %v39, %v32
  %v45 = vadd.f32 %v21, %v43
  %46 = vst [vmem:[#allocation2] sm:$0x3] %v45
  // Predicated region
  $region18: #{tpu_custom_call.1} parent=0 // pred_check
    %p47 = pneg %p16
  $region19: #{tpu_custom_call.1} parent=0 // pred_check_branch
    %49 = sbr.rel (%p47) target = $region21
  $region20: #{tpu_custom_call.1} parent=0 // pred_region
    %v50 = vld [vmem:[#allocation2] sm:$0x3]
    %v51 = vmul.f32 %v50, 0.0625
    %v52 = vmul.f32 %v51, %v51
    %vm53 = vcmask 1041408
    %v54 = vsel %vm53, %v52, 0.0
    %55 = vadd.xlane.f32.xlu0 %v54
    %v56 = vpop.xlane.xlu0 %55
    %v57 = vrsqrt.pop %v56
    %v58 = vmul.f32 %v56, %v57
    %vm59 = vcmp.eq.f32.partialorder %v56, inf
    %v60 = vsel %vm59, %v56, %v58
    %vm61 = vcmp.eq.f32.partialorder %v56, 0.0
    %v62 = vand.u32 %v56, 2147483648
    %v63 = vsel %vm61, %v62, %v60
    %v64 = vadd.f32 %v63, 1e-05
    %v65 = vrcp.pop %v64
    %v66 = vmul.f32 %v51, %v65
    %v67 = vld [vmem:[%s1] sm:$0xff]
    %v68 = vld [vmem:[%s1 + $0x8] sm:$0xff]
    %v69 = vld [vmem:[%s1 + $0x10] sm:$0xff]
    %v70 = vld [vmem:[%s1 + $0x18] sm:$0xff]
    %v71 = vld [vmem:[%s1 + $0x20] sm:$0xff]
    %v72 = vld [vmem:[%s1 + $0x28] sm:$0xff]
    %v73 = vld [vmem:[%s1 + $0x30] sm:$0xff]
    %v74 = vld [vmem:[%s1 + $0x38] sm:$0xff]
    %v75 = vld [vmem:[%s1 + $0x40] sm:$0xff]
    %v76 = vld [vmem:[%s1 + $0x48] sm:$0xff]
    %v77 = vld [vmem:[%s1 + $0x50] sm:$0xff]
    %v78 = vld [vmem:[%s1 + $0x58] sm:$0xff]
    %v79 = vld [vmem:[%s1 + $0x60] sm:$0xff]
    %v80 = vld [vmem:[%s1 + $0x68] sm:$0xff]
    %v81 = vld [vmem:[%s1 + $0x70] sm:$0xff]
    %v82 = vld [vmem:[%s1 + $0x78] sm:$0xff]
    %83 = vmatprep.subr.mxu0 0.0
    %84 = vmatpush1.msra.mxu0 %v67
    %85 = vmatprep.subr.mxu0 0.0
    %86 = vmatpush1.msra.mxu0 %v68
    %87 = vmatprep.subr.mxu0 0.0
    %88 = vmatpush1.msra.mxu0 %v69
    %89 = vmatprep.subr.mxu0 0.0
    %90 = vmatpush1.msra.mxu0 %v70
    %91 = vmatprep.subr.mxu0 0.0
    %92 = vmatpush1.msra.mxu0 %v71
    %93 = vmatprep.subr.mxu0 0.0
    %94 = vmatpush1.msra.mxu0 %v72
    %95 = vmatprep.subr.mxu0 0.0
    %96 = vmatpush1.msra.mxu0 %v73
    %97 = vmatprep.subr.mxu0 0.0
    %98 = vmatpush1.msra.mxu0 %v74
    %99 = vmatprep.subr.mxu0 0.0
    %100 = vmatpush1.msra.mxu0 %v75
    %101 = vmatprep.subr.mxu0 0.0
    %102 = vmatpush1.msra.mxu0 %v76
    %103 = vmatprep.subr.mxu0 0.0
    %104 = vmatpush1.msra.mxu0 %v77
    %105 = vmatprep.subr.mxu0 0.0
    %106 = vmatpush1.msra.mxu0 %v78
    %107 = vmatprep.subr.mxu0 0.0
    %108 = vmatpush1.msra.mxu0 %v79
    %109 = vmatprep.subr.mxu0 0.0
    %110 = vmatpush1.msra.mxu0 %v80
    %111 = vmatprep.subr.mxu0 0.0
    %112 = vmatpush1.msra.mxu0 %v81
    %113 = vmatprep.subr.mxu0 0.0
    %114 = vmatpush1.msra.mxu0 %v82
    %115 = vmatprep.subr.mxu0 0.0
    %116 = vmatpush1.msra.mxu0 0.0
    %117 = vmatprep.subr.mxu0 0.0
    %118 = vmatpush1.msra.mxu0 0.0
    %119 = vmatprep.subr.mxu0 0.0
    %120 = vmatpush1.msra.mxu0 0.0
    %121 = vmatprep.subr.mxu0 0.0
    %122 = vmatpush1.msra.mxu0 0.0
    %123 = vmatprep.subr.mxu0 0.0
    %124 = vmatpush1.msra.mxu0 0.0
    %125 = vmatprep.subr.mxu0 0.0
    %126 = vmatpush1.msra.mxu0 0.0
    %127 = vmatprep.subr.mxu0 0.0
    %128 = vmatpush1.msra.mxu0 0.0
    %129 = vmatprep.subr.mxu0 0.0
    %130 = vmatpush1.msra.mxu0 0.0
    %131 = vmatprep.subr.mxu0 0.0
    %132 = vmatpush1.msra.mxu0 0.0
    %133 = vmatprep.subr.mxu0 0.0
    %134 = vmatpush1.msra.mxu0 0.0
    %135 = vmatprep.subr.mxu0 0.0
    %136 = vmatpush1.msra.mxu0 0.0
    %137 = vmatprep.subr.mxu0 0.0
    %138 = vmatpush1.msra.mxu0 0.0
    %139 = vmatprep.subr.mxu0 0.0
    %140 = vmatpush1.msra.mxu0 0.0
    %141 = vmatprep.subr.mxu0 0.0
    %142 = vmatpush1.msra.mxu0 0.0
    %143 = vmatprep.subr.mxu0 0.0
    %144 = vmatpush1.msra.mxu0 0.0
    %145 = vmatprep.subr.mxu0 0.0
    %146 = vmatpush1.msra.mxu0 0.0
    %147 = vmatprep.mubr.f32.mxu0 0.0
    %148 = vmatmul.mubr.f32.gmra.mrb[0].mxu0 %v66
    %v149 = vpop.f32.mrb[0].mxu0
    %v150 = vadd.f32 1.0, %v149
    %v151 = vpop.f32.mrb[0].mxu0
    %152 = vdwg.mxu0
    %v153 = vmul.f32 %v150, 0.5
    %v154 = vmax.f32 %v153, 0.0
    %v155 = vmin.f32 %v154, 1.0
    %v156 = vld [vmem:[%s2] sm:$0x3]
    %vm157 = vcmask 58368
    %v158 = vsel %vm157, %v156, 0.0
    %159 = vadd.xlane.f32.xlu0 %v158
    %v160 = vpop.xlane.xlu0 %159
    %v161 = vadd.f32 %v160, 1e-05
    %v162 = vrcp.pop %v161
    %v163 = vsub.f32 1.0, %v156
    %v164 = vsel %vm157, %v163, 0.0
    %165 = vadd.xlane.f32.xlu0 %v164
    %v166 = vpop.xlane.xlu0 %165
    %v167 = vadd.f32 %v166, 1e-05
    %v168 = vrcp.pop %v167
    %v169 = vmul.f32 %v155, 0.99
    %v170 = vadd.f32 %v169, 0.01
    %v171 = vlog2.pop %v170
    %v172 = vmul.f32 %v171, 0.6931472
    %v173 = vmul.f32 %v156, %v172
    %v174 = vsel %vm157, %v173, 0.0
    %175 = vadd.xlane.f32.xlu0 %v174
    %v176 = vpop.xlane.xlu0 %175
    %v177 = vsub.f32 0.0, %v176
    %v178 = vmul.f32 %v177, %v162
    %v179 = vsub.f32 1.0, %v169
    %v180 = vlog2.pop %v179
    %v181 = vmul.f32 %v180, 0.6931472
    %v182 = vmul.f32 %v163, %v181
    %v183 = vsel %vm157, %v182, 0.0
    %184 = vadd.xlane.f32.xlu0 %v183
    %v185 = vpop.xlane.xlu0 %184
    %v186 = vsub.f32 0.0, %v185
    %v187 = vmul.f32 %v186, %v168
    %v188 = vadd.f32 %v178, %v187
    %vm189 = vcmask 1024
    %190 = vst.msk [vmem:[%s3] sm:$0x3] %vm189, %v188
    %v191 = vsel %vm157, %v155, -inf
    %192 = vmax.xlane.f32.xlu0 %v191
    %v193 = vpop.xlane.xlu0 %192
    %v194 = vlaneseq
    %v195 = vand.u32 %v194, 127
    %vm196 = vcmp.eq.f32.partialorder %v155, %v193
    %v197 = vsel %vm196, %v195, 8
    %v198 = vsel %vm157, %v197, 2147483647
    %v199 = vand.u32 %v198, 65535
    %v200 = vshra.s32 %v198, 16
    %v201 = vcvt.s32.f32 %v199
    %v202 = vcvt.s32.f32 %v200
    %203 = vmin.xlane.f32.xlu0 %v202
    %v204 = vpop.xlane.xlu0 %203
    %vm205 = vcmp.eq.f32.partialorder %v202, %v204
    %v206 = vsel %vm205, %v201, inf
    %207 = vmin.xlane.f32.xlu0 %v206
    %v208 = vpop.xlane.xlu0 %207
    %v209 = vcvt.f32.s32 %v208
    %v210 = vcvt.f32.s32 %v204
    %v211 = vshll.u32 %v210, 16
    %v212 = vadd.s32 %v211, %v209
    %213 = vst.msk [vmem:[%s4] sm:$0x3] %vm189, %v212
  $region21: #{tpu_custom_call.1} parent=0 // pred_fallthru
    _
  // Predicated region
  $region22: #{tpu_custom_call.1} parent=0 // pred_check
    _
  $region23: #{tpu_custom_call.1} parent=0 // pred_check_branch
    %215 = sbr.rel (0) target = $region25
  $region24: #{tpu_custom_call.1} parent=0 // pred_region
    _
  $region25: #{tpu_custom_call.1} parent=0 // pred_fallthru
    _
  // Predicated region
  $region26: #{tpu_custom_call.1} parent=0 // pred_check
    _
  $region27: #{tpu_custom_call.1} parent=0 // pred_check_branch
    %217 = sbr.rel (0) target = $region29
  $region28: #{tpu_custom_call.1} parent=0 // pred_region
    _
  $region29: #{tpu_custom_call.1} parent=0 // pred_fallthru
    _
  // Predicated region
  $region30: #{tpu_custom_call.1} parent=0 // pred_check
    _
  $region31: #{tpu_custom_call.1} parent=0 // pred_check_branch
    %219 = sbr.rel (0) target = $region33
  $region32: #{tpu_custom_call.1} parent=0 // pred_region
    _
  $region33: #{tpu_custom_call.1} parent=0 // pred_fallthru
    _
  // Predicated region
  $region34: #{tpu_custom_call.1} parent=0 // pred_check
    _
  $region35: #{tpu_custom_call.1} parent=0 // pred_check_branch
    %221 = sbr.rel (0) target = $region37
  $region36: #{tpu_custom_call.1} parent=0 // pred_region
    _
  $region37: #{tpu_custom_call.1} parent=0 // pred_fallthru
    _

</llo_original>
